<compile_context>
chip_gen: v6e
topology: v6e:2x2x1
jax: 0.10.0
libtpu: 0.0.40
codegen_flags: <defaults>
</compile_context>

<pallas_src>
import jax
import jax.numpy as jnp
from jax import lax
from jax.experimental import pallas as pl
from jax.experimental.pallas import tpu as pltpu


def _round_up(x: int, m: int) -> int:
    return ((x + m - 1) // m) * m


def mlp_kernel(x_ref, w1T_ref, b1_ref, w2_ref, b2_ref, oT_ref):
    # Layer 1 on the MXU: contract the feature axis of BOTH operands
    # ('od,bd->ob'), so the (TB, D0) x tile is consumed straight in its natural
    # HBM layout (no wrapper transpose pass) and the result already has the
    # batch on the 128-lane axis: h is (D1, TB), f32-accumulated.
    h = lax.dot_general(
        w1T_ref[...], x_ref[...],
        dimension_numbers=(((1,), (1,)), ((), ())),
        preferred_element_type=jnp.float32,
    )
    # Bias (D1, 1) broadcasts over lanes; ReLU on the VPU (all f32 -> fine on v5e).
    h = jnp.maximum(h + b1_ref[...], 0.0)
    # Layer 2 (out units == 1): VPU multiply + sublane (XLU) reduce instead of a
    # wasteful N=1 MXU matmul; result stays lane-dense.
    y = jnp.sum(h * w2_ref[...], axis=0, keepdims=True) + b2_ref[...]
    oT_ref[...] = y.astype(oT_ref.dtype)  # lane-dense (1, TB) store


def pallas_mlp(x, w1, b1, w2, b2, *, batch_tile=16384, use_bf16=False):
    """x: (B, D0) f32; w1: (D0, D1); b1: (1, D1); w2: (D1, 1); b2: (1, 1).

    NOTE: w1/w2 are stored as (in, out) -- the transpose of PyTorch nn.Linear's
    weight -- and biases as (1, out).
    """
    B, D0 = x.shape
    D1 = w1.shape[1]
    D2 = w2.shape[1]
    assert D2 == 1, "final layer of this config has a single output unit"

    # ---- Batch tile selection ---------------------------------------------
    #  * multiple of 128 so the (1, TB) output store is an unmasked lane-dense
    #    write,
    #  * big (default 16384 -> 2 MiB of x per step in f32) so per-step DMA time
    #    dominates the ~0.35 us/step pipeline overhead,
    #  * capped at ceil(B/2) so there are always >= 2 grid steps when B > 128
    #    and the "parallel" axis can shard across v7x's two TensorCores.
    if B <= 128:
        TB = 128
    else:
        TB = min(_round_up(int(batch_tile), 128), _round_up(pl.cdiv(B, 2), 128))
    num_tiles = pl.cdiv(B, TB)
    B_pad = num_tiles * TB  # only the (tiny) OUTPUT is padded; x is read in place

    # x stays in its natural (B, D0) layout: no transpose / pad pass over x in
    # HBM.  The last grid step may read past row B; that garbage only reaches
    # output columns >= B, which are sliced off below (columns independent).
    in_dtype = jnp.bfloat16 if use_bf16 else x.dtype
    xk = x if x.dtype == in_dtype else x.astype(in_dtype)
    w1T = w1.T.astype(in_dtype)                          # (D1, D0), tiny
    b1c = b1.astype(jnp.float32).reshape(D1, 1)          # (D1, 1)
    w2c = w2.astype(jnp.float32).reshape(D1, 1)          # (D1, 1)
    b2c = b2.astype(jnp.float32).reshape(1, 1)           # (1, 1)

    itemsize = jnp.dtype(in_dtype).itemsize
    cost = pl.CostEstimate(
        flops=2 * B_pad * D0 * D1 + 4 * B_pad * D1 + 2 * B_pad,
        transcendentals=0,
        bytes_accessed=B * D0 * itemsize + B_pad * 4 + (D0 * D1 + 2 * D1 + 1) * 4,
    )

    # Worst-case VMEM footprint at TB=16384 (double-buffered, lane-padded x tile
    # + in-kernel temps) is ~23 MiB: above v5e's 16 MiB scoped default, well
    # under v7x's 64 MiB physical.  Only raise the limit when actually needed
    # so small/demo shapes keep the stock compiler settings.
    extra = {"vmem_limit_bytes": 48 * 1024 * 1024} if TB > 8192 else {}

    yT = pl.pallas_call(
        mlp_kernel,
        out_shape=jax.ShapeDtypeStruct((1, B_pad), jnp.float32),
        grid=(num_tiles,),
        in_specs=[
            # Streaming x tile, natural layout (last block may be partial/OOB).
            pl.BlockSpec((TB, D0), lambda i: (i, 0)),
            # Weights / biases: resident in VMEM across all grid steps.
            pl.BlockSpec((D1, D0), lambda i: (0, 0)),
            pl.BlockSpec((D1, 1), lambda i: (0, 0)),
            pl.BlockSpec((D1, 1), lambda i: (0, 0)),
            pl.BlockSpec((1, 1), lambda i: (0, 0)),
        ],
        out_specs=pl.BlockSpec((1, TB), lambda i: (0, i)),
        compiler_params=pltpu.CompilerParams(
            dimension_semantics=("parallel",),
            **extra,
        ),
        cost_estimate=cost,
    )(xk, w1T, b1c, w2c, b2c)

    # Drop the output-only padding and return the PyTorch-shaped (B, 1) result
    # (a tiny wrapper-side transpose of B elements: layout plumbing, not compute).
    return yT[:, :B].T


def reference_mlp(x, w1, b1, w2, b2):
    h = jnp.maximum(x @ w1 + b1, 0.0)
    return h @ w2 + b2


if __name__ == "__main__":
    key = jax.random.PRNGKey(0)
    kx, kw1, kb1, kw2, kb2 = jax.random.split(key, 5)

    B, D0, D1, D2 = 8, 32, 16, 1

    x = jax.random.normal(kx, (B, D0), dtype=jnp.float32)
    # Deterministic "Kaiming-like" small init (synthetic, no checkpoint load).
    w1 = jax.random.normal(kw1, (D0, D1), dtype=jnp.float32) * (1.0 / jnp.sqrt(D0))
    b1 = jax.random.normal(kb1, (1, D1), dtype=jnp.float32) * 0.01
    w2 = jax.random.normal(kw2, (D1, D2), dtype=jnp.float32) * (1.0 / jnp.sqrt(D1))
    b2 = jax.random.normal(kb2, (1, D2), dtype=jnp.float32) * 0.01

    out = jax.block_until_ready(pallas_mlp(x, w1, b1, w2, b2))
    ref = reference_mlp(x, w1, b1, w2, b2)

    assert out.shape == (B, D2), out.shape
    assert jnp.allclose(out, ref, atol=1e-5, rtol=1e-5)

    print("KERNEL_OK")
</pallas_src>

<mosaic_0001>
module attributes {stable_mosaic.version = 11 : i64} {
  func.func @mlp_kernel(%arg0: i32, %arg1: memref<128x32xf32, #tpu.memory_space<vmem>>, %arg2: memref<16x32xf32, #tpu.memory_space<vmem>>, %arg3: memref<16x1xf32, #tpu.memory_space<vmem>>, %arg4: memref<16x1xf32, #tpu.memory_space<vmem>>, %arg5: memref<1x1xf32, #tpu.memory_space<vmem>>, %arg6: memref<1x128xf32, #tpu.memory_space<vmem>>) attributes {dimension_semantics = [#tpu.dimension_semantics<parallel>], iteration_bounds = array<i64: 1>, scalar_prefetch = 0 : i64, scratch_operands = 0 : i64, tpu.core_type = #tpu.core_type<tc>, window_params = [{transform_indices = @transform_0, window_bounds = array<i64: 128, 32>}, {pipeline_mode = #tpu.pipeline_mode<synchronous>, transform_indices = @transform_1, window_bounds = array<i64: 16, 32>}, {pipeline_mode = #tpu.pipeline_mode<synchronous>, transform_indices = @transform_2, window_bounds = array<i64: 16, 1>}, {pipeline_mode = #tpu.pipeline_mode<synchronous>, transform_indices = @transform_3, window_bounds = array<i64: 16, 1>}, {pipeline_mode = #tpu.pipeline_mode<synchronous>, transform_indices = @transform_4, window_bounds = array<i64: 1, 1>}, {transform_indices = @transform_5, window_bounds = array<i64: 1, 128>}]} {
    %c0 = arith.constant 0 : index
    %c0_0 = arith.constant 0 : index
    %0 = vector.load %arg2[%c0, %c0_0] : memref<16x32xf32, #tpu.memory_space<vmem>>, vector<16x32xf32>
    %c0_1 = arith.constant 0 : index
    %c0_2 = arith.constant 0 : index
    %1 = vector.load %arg1[%c0_1, %c0_2] : memref<128x32xf32, #tpu.memory_space<vmem>>, vector<128x32xf32>
    %cst = arith.constant dense<0.000000e+00> : vector<16x128xf32>
    %2 = tpu.matmul %0, %1, %cst {dimension_numbers = #tpu.dot_dimension_numbers<[1], [1], [0], [0], [0, 0, 1, 0], [], []>} : vector<16x32xf32>, vector<128x32xf32>, vector<16x128xf32> -> vector<16x128xf32>
    %c0_3 = arith.constant 0 : index
    %c0_4 = arith.constant 0 : index
    %3 = vector.load %arg3[%c0_3, %c0_4] : memref<16x1xf32, #tpu.memory_space<vmem>>, vector<16x1xf32>
    %4 = vector.broadcast %3 : vector<16x1xf32> to vector<16x128xf32>
    %5 = arith.addf %2, %4 : vector<16x128xf32>
    %cst_5 = arith.constant 0.000000e+00 : f32
    %6 = vector.broadcast %cst_5 : f32 to vector<16x128xf32>
    %7 = arith.maximumf %5, %6 : vector<16x128xf32>
    %c0_6 = arith.constant 0 : index
    %c0_7 = arith.constant 0 : index
    %8 = vector.load %arg4[%c0_6, %c0_7] : memref<16x1xf32, #tpu.memory_space<vmem>>, vector<16x1xf32>
    %9 = vector.broadcast %8 : vector<16x1xf32> to vector<16x128xf32>
    %10 = arith.mulf %7, %9 : vector<16x128xf32>
    %cst_8 = arith.constant dense<0.000000e+00> : vector<128xf32>
    %11 = vector.multi_reduction <add>, %10, %cst_8 [0] : vector<16x128xf32> to vector<128xf32>
    %12 = vector.shape_cast %11 : vector<128xf32> to vector<1x128xf32>
    %c0_9 = arith.constant 0 : index
    %c0_10 = arith.constant 0 : index
    %13 = vector.load %arg5[%c0_9, %c0_10] : memref<1x1xf32, #tpu.memory_space<vmem>>, vector<1x1xf32>
    %14 = vector.broadcast %13 : vector<1x1xf32> to vector<1x128xf32>
    %15 = arith.addf %12, %14 : vector<1x128xf32>
    %c0_11 = arith.constant 0 : index
    %c0_12 = arith.constant 0 : index
    %16 = vector.load %arg6[%c0_11, %c0_12] : memref<1x128xf32, #tpu.memory_space<vmem>>, vector<1x128xf32>
    tpu.vector_store %arg6[%c0_11, %c0_12], %15 {strides = array<i32>} : memref<1x128xf32, #tpu.memory_space<vmem>>, vector<1x128xf32>,
    return
  }
  func.func @transform_0(%arg0: i32) -> (i32, i32) {
    %c0_i32 = arith.constant 0 : i32
    %c0_i32_0 = arith.constant 0 : i32
    return %arg0, %c0_i32 : i32, i32
  }
  func.func @transform_1(%arg0: i32) -> (i32, i32) {
    %c0_i32 = arith.constant 0 : i32
    %c0_i32_0 = arith.constant 0 : i32
    %c0_i32_1 = arith.constant 0 : i32
    return %c0_i32, %c0_i32_0 : i32, i32
  }
  func.func @transform_2(%arg0: i32) -> (i32, i32) {
    %c0_i32 = arith.constant 0 : i32
    %c0_i32_0 = arith.constant 0 : i32
    %c0_i32_1 = arith.constant 0 : i32
    return %c0_i32, %c0_i32_0 : i32, i32
  }
  func.func @transform_3(%arg0: i32) -> (i32, i32) {
    %c0_i32 = arith.constant 0 : i32
    %c0_i32_0 = arith.constant 0 : i32
    %c0_i32_1 = arith.constant 0 : i32
    return %c0_i32, %c0_i32_0 : i32, i32
  }
  func.func @transform_4(%arg0: i32) -> (i32, i32) {
    %c0_i32 = arith.constant 0 : i32
    %c0_i32_0 = arith.constant 0 : i32
    %c0_i32_1 = arith.constant 0 : i32
    return %c0_i32, %c0_i32_0 : i32, i32
  }
  func.func @transform_5(%arg0: i32) -> (i32, i32) {
    %c0_i32 = arith.constant 0 : i32
    %c0_i32_0 = arith.constant 0 : i32
    return %c0_i32, %arg0 : i32, i32
  }
}

</mosaic_0001>

<llo_original>
// kernel: tpu_custom_call.1
$region0: #{tpu_custom_call.1}
  #allocation0 [shape = 'u32[]', space=smem, size = 0x4, offset = 0x4, fixed_abs, tag = 'smem constant byte address 0x4 - core index']
  #allocation1 [shape = 'u32[144,128]{1,0:T(1,128)}', space=vmem, size = 0x12000, scoped, tag = 'internal scratch']
  #allocation2 [shape = 'f32[1,1]{1,0:T(1,128)S(1)}', space=vmem, size = 0x200, scoped, tag = 'scoped memory for tpu_custom_call.1']
  %s0 = inlined_call_operand.vmem [shape: f32[8,32], index: 0, kind: input, shape index: {}]
  %s1 = inlined_call_operand.vmem [shape: f32[16,32], index: 1, kind: input, shape index: {}]
  %s2 = inlined_call_operand.vmem [shape: f32[16,1], index: 2, kind: input, shape index: {}]
  %s3 = inlined_call_operand.vmem [shape: f32[16,1], index: 3, kind: input, shape index: {}]
  %s4 = inlined_call_operand.<no memory space> [shape: f32[1,1], index: 4, kind: input, shape index: {}]
  %s5 = inlined_call_operand.hbm [shape: f32[1,128], index: 5, kind: output, shape index: {}]
  %s6 = sld [smem:[#allocation0]]
  $region30: #{tpu_custom_call.1} parent=0
    _
  %s8 = ssub.s32 1, %s6
  %s9 = scalar_select 0, %s8, %s6
  %v10 = vstv %s4
  %11 = vst [vmem:[#allocation2] sm:$0x1] %v10
  $region1: #{tpu_custom_call.1} parent=0
    #allocation3 [shape = 'u8[512]{0}', space=vmem, size = 0x400, scoped, tag = 'output window, operand 0, single buffered']
    #allocation4 [shape = 's32[1]{0}', space=sflag, size = 0x4, scoped, tag = 'scoped memory for tpu_custom_call.1']
    %12 = vsyncpa [#allocation4], 0
    // Predicated region
    $region2: #{tpu_custom_call.1} parent=1 // pred_check
      _
    $region3: #{tpu_custom_call.1} parent=1 // pred_check_branch
      %14 = sbr.rel (0) target = $region5
    $region4: #{tpu_custom_call.1} parent=1 // pred_region
      _
    $region5: #{tpu_custom_call.1} parent=1 // pred_fallthru
      _
    // Predicated region
    $region6: #{tpu_custom_call.1} parent=1 // pred_check
      _
    $region7: #{tpu_custom_call.1} parent=1 // pred_check_branch
      %16 = sbr.rel (0) target = $region9
    $region8: #{tpu_custom_call.1} parent=1 // pred_region
      _
    $region9: #{tpu_custom_call.1} parent=1 // pred_fallthru
      _
    // Predicated region
    $region10: #{tpu_custom_call.1} parent=1 // pred_check
      _
    $region11: #{tpu_custom_call.1} parent=1 // pred_check_branch
      %18 = sbr.rel (0) target = $region13
    $region12: #{tpu_custom_call.1} parent=1 // pred_region
      _
    $region13: #{tpu_custom_call.1} parent=1 // pred_fallthru
      _
    // Predicated region
    $region14: #{tpu_custom_call.1} parent=1 // pred_check
      _
    $region15: #{tpu_custom_call.1} parent=1 // pred_check_branch
      %20 = sbr.rel (0) target = $region17
    $region16: #{tpu_custom_call.1} parent=1 // pred_region
      _
    $region17: #{tpu_custom_call.1} parent=1 // pred_fallthru
      _
    // Predicated region
    $region18: #{tpu_custom_call.1} parent=1 // pred_check
      _
    $region19: #{tpu_custom_call.1} parent=1 // pred_check_branch
      %22 = sbr.rel (0) target = $region21
    $region20: #{tpu_custom_call.1} parent=1 // pred_region
      _
    $region21: #{tpu_custom_call.1} parent=1 // pred_fallthru
      _
    %v23 = vld [vmem:[%s1] sm:$0xff]
    %v24 = vld [vmem:[%s1 + $0x8] sm:$0xff]
    %v25 = vld [vmem:[%s0] sm:$0xff]
    %v26 = vld [vmem:[%s0 + $0x8] sm:$0xff]
    %v27 = vld [vmem:[%s0 + $0x10] sm:$0xff]
    %v28 = vld [vmem:[%s0 + $0x18] sm:$0xff]
    %v29 = vld [vmem:[%s0 + $0x20] sm:$0xff]
    %v30 = vld [vmem:[%s0 + $0x28] sm:$0xff]
    %v31 = vld [vmem:[%s0 + $0x30] sm:$0xff]
    %v32 = vld [vmem:[%s0 + $0x38] sm:$0xff]
    %v33 = vld [vmem:[%s0 + $0x40] sm:$0xff]
    %v34 = vld [vmem:[%s0 + $0x48] sm:$0xff]
    %v35 = vld [vmem:[%s0 + $0x50] sm:$0xff]
    %v36 = vld [vmem:[%s0 + $0x58] sm:$0xff]
    %v37 = vld [vmem:[%s0 + $0x60] sm:$0xff]
    %v38 = vld [vmem:[%s0 + $0x68] sm:$0xff]
    %v39 = vld [vmem:[%s0 + $0x70] sm:$0xff]
    %v40 = vld [vmem:[%s0 + $0x78] sm:$0xff]
    %v41 = vld [vmem:[%s2] sm:$0xff]
    %v42 = vld [vmem:[%s2 + $0x8] sm:$0xff]
    %44 = vset.pattern.permute.xlu0 0
    %45 = vperm.xlu0 %44, %v41
    %v46 = vpop.permute.xlu0 %45
    %49 = vset.pattern.permute.xlu0 0
    %50 = vperm.xlu0 %49, %v42
    %v51 = vpop.permute.xlu0 %50
    %vm53 = vcmask 261120
    %v55 = vsel %vm53, %v23, 0
    %v58 = vsel %vm53, %v24, 0
    %v61 = vsel %vm53, %v25, 0
    %v64 = vsel %vm53, %v26, 0
    %v67 = vsel %vm53, %v27, 0
    %v70 = vsel %vm53, %v28, 0
    %v73 = vsel %vm53, %v29, 0
    %v76 = vsel %vm53, %v30, 0
    %v79 = vsel %vm53, %v31, 0
    %v82 = vsel %vm53, %v32, 0
    %v85 = vsel %vm53, %v33, 0
    %v88 = vsel %vm53, %v34, 0
    %v91 = vsel %vm53, %v35, 0
    %v94 = vsel %vm53, %v36, 0
    %v97 = vsel %vm53, %v37, 0
    %v100 = vsel %vm53, %v38, 0
    %v103 = vsel %vm53, %v39, 0
    %v106 = vsel %vm53, %v40, 0
    %108 = vmatprep.subr.mxu0 0.0
    %109 = vmatpush1.xpose.msra.mxu0 %v106
    %110 = vmatprep.subr.mxu0 0.0
    %111 = vmatpush1.xpose.msra.mxu0 %v103
    %112 = vmatprep.subr.mxu0 0.0
    %113 = vmatpush1.xpose.msra.mxu0 %v100
    %114 = vmatprep.subr.mxu0 0.0
    %115 = vmatpush1.xpose.msra.mxu0 %v97
    %116 = vmatprep.subr.mxu0 0.0
    %117 = vmatpush1.xpose.msra.mxu0 %v94
    %118 = vmatprep.subr.mxu0 0.0
    %119 = vmatpush1.xpose.msra.mxu0 %v91
    %120 = vmatprep.subr.mxu0 0.0
    %121 = vmatpush1.xpose.msra.mxu0 %v88
    %122 = vmatprep.subr.mxu0 0.0
    %123 = vmatpush1.xpose.msra.mxu0 %v85
    %124 = vmatprep.subr.mxu0 0.0
    %125 = vmatpush1.xpose.msra.mxu0 %v82
    %126 = vmatprep.subr.mxu0 0.0
    %127 = vmatpush1.xpose.msra.mxu0 %v79
    %128 = vmatprep.subr.mxu0 0.0
    %129 = vmatpush1.xpose.msra.mxu0 %v76
    %130 = vmatprep.subr.mxu0 0.0
    %131 = vmatpush1.xpose.msra.mxu0 %v73
    %132 = vmatprep.subr.mxu0 0.0
    %133 = vmatpush1.xpose.msra.mxu0 %v70
    %134 = vmatprep.subr.mxu0 0.0
    %135 = vmatpush1.xpose.msra.mxu0 %v67
    %136 = vmatprep.subr.mxu0 0.0
    %137 = vmatpush1.xpose.msra.mxu0 %v64
    %138 = vmatprep.subr.mxu0 0.0
    %139 = vmatpush1.xpose.msra.mxu0 %v61
    %140 = vmatprep.subr.mxu0 0.0
    %141 = vmatpush2.xpose.msra.mxu0 0.0
    %142 = vmatprep.subr.mxu0 0.0
    %143 = vmatpush2.xpose.msra.mxu0 0.0
    %144 = vmatprep.subr.mxu0 0.0
    %145 = vmatpush2.xpose.msra.mxu0 0.0
    %146 = vmatprep.subr.mxu0 0.0
    %147 = vmatpush2.xpose.msra.mxu0 0.0
    %148 = vmatprep.subr.mxu0 0.0
    %149 = vmatpush2.xpose.msra.mxu0 0.0
    %150 = vmatprep.subr.mxu0 0.0
    %151 = vmatpush2.xpose.msra.mxu0 0.0
    %152 = vmatprep.subr.mxu0 0.0
    %153 = vmatpush2.xpose.msra.mxu0 0.0
    %154 = vmatprep.subr.mxu0 0.0
    %155 = vmatpush2.xpose.msra.mxu0 0.0
    %156 = vmatprep.subr.mxu0 0.0
    %157 = vmatpush2.xpose.msra.mxu0 0.0
    %158 = vmatprep.subr.mxu0 0.0
    %159 = vmatpush2.xpose.msra.mxu0 0.0
    %160 = vmatprep.subr.mxu0 0.0
    %161 = vmatpush2.xpose.msra.mxu0 0.0
    %162 = vmatprep.subr.mxu0 0.0
    %163 = vmatpush2.xpose.msra.mxu0 0.0
    %164 = vmatprep.subr.mxu0 0.0
    %165 = vmatpush2.xpose.msra.mxu0 0.0
    %166 = vmatprep.subr.mxu0 0.0
    %167 = vmatpush2.xpose.msra.mxu0 0.0
    %168 = vmatprep.subr.mxu0 0.0
    %169 = vmatpush2.xpose.msra.mxu0 0.0
    %170 = vmatprep.subr.mxu0 0.0
    %171 = vmatpush2.xpose.msra.mxu0 0.0
    %172 = vmatprep.mubr.f32.mxu0 0.0
    %173 = vmatmul.mubr.f32.gmra.mxu0 %v55
    %v174 = vpop.f32.mrf.mxu0
    %v175 = vadd.f32 %v46, %v174
    %v176 = vpop.f32.mrf.mxu0
    %177 = vmatprep.mubr.f32.mxu0 0.0
    %178 = vmatmul.mubr.f32.gmra.mxu0 %v58
    %v179 = vpop.f32.mrf.mxu0
    %v180 = vadd.f32 %v51, %v179
    %v181 = vpop.f32.mrf.mxu0
    %182 = vdwg.mxu0
    %v183 = vmax.f32 %v175, 0.0
    %v184 = vmax.f32 %v180, 0.0
    %v185 = vld [vmem:[%s3] sm:$0xff]
    %v186 = vld [vmem:[%s3 + $0x8] sm:$0xff]
    %188 = vset.pattern.permute.xlu0 0
    %189 = vperm.xlu0 %188, %v185
    %v190 = vpop.permute.xlu0 %189
    %193 = vset.pattern.permute.xlu0 0
    %194 = vperm.xlu0 %193, %v186
    %v195 = vpop.permute.xlu0 %194
    %v197 = vmul.f32 %v183, %v190
    %v198 = vmul.f32 %v184, %v195
    %v199 = vadd.f32 %v197, %v198
    %v200 = vrot.slane %v199, 4
    %v201 = vadd.f32 %v199, %v200
    %v202 = vrot.slane %v201, 2
    %v203 = vadd.f32 %v201, %v202
    %v204 = vrot.slane %v203, 1
    %v205 = vadd.f32 %v203, %v204
    %v206 = vld [vmem:[#allocation2] sm:$0x1]
    %208 = vset.pattern.permute.xlu0 0
    %209 = vperm.xlu0 %208, %v206
    %v210 = vpop.permute.xlu0 %209
    %v212 = vlaneseq
    %v213 = vshrl.u32 %v212, 7
    %v214 = vsub.s32 0, %v213
    %v215 = vrot.slane %v210, %v214
    %v216 = vadd.f32 %v205, %v215
    %217 = vst [vmem:[#allocation3] sm:$0x1] %v216
    // Predicated region
    $region22: #{tpu_custom_call.1} parent=1 // pred_check
      _
    $region23: #{tpu_custom_call.1} parent=1 // pred_check_branch
      %219 = sbr.rel (0) target = $region25
    $region24: #{tpu_custom_call.1} parent=1 // pred_region
      %s221 = ssub.s32 16, 16
      %222 = vsyncadd [#allocation4], %s221
      %s224 = sshll.u32 [#allocation3], 4
      %s225 = int_to_ptr.vmem [resolvable:$true] %s224
      %227 = dma.vmem_to_hbm [thread:$0]  %s225, 16, %s5, [#allocation4]
    $region25: #{tpu_custom_call.1} parent=1 // pred_fallthru
      _
    // Predicated region
    $region26: #{tpu_custom_call.1} parent=1 // pred_check
      _
    $region27: #{tpu_custom_call.1} parent=1 // pred_check_branch
      %229 = sbr.rel (0) target = $region29
    $region28: #{tpu_custom_call.1} parent=1 // pred_region
      %230 = dma.done [#allocation4], 16
    $region29: #{tpu_custom_call.1} parent=1 // pred_fallthru
      _
    %231 = vsyncpa [#allocation4], 1

</llo_original>
